<compile_context>
chip_gen: v6e
topology: v6e:2x2x1
jax: 0.10.0
libtpu: 0.0.40
codegen_flags: <defaults>
</compile_context>

<pallas_src>
import jax
import jax.numpy as jnp
from jax.experimental import pallas as pl
from jax.experimental.pallas import tpu as pltpu

LN_EPS = 1e-5     # PyTorch nn.LayerNorm default
TR_MAX = 2048     # packed rows per tile (= TR_MAX * PACK nodes per grid step)


def _node_network_kernel(x_ref, w0_ref, w_ref, aff_ref, smean_ref, o_ref):
    """Fused 4x [Linear -> LayerNorm -> Tanh] on a lane-packed node tile."""
    s_mean = smean_ref[...]                       # (L, L) f32 block-diag ones/D

    def layer(h_bf16, w_bf16, a):
        # Centered linear (mean fold): W_d = W_bd @ (I - S_mean), b_d centered,
        # so d = (h @ W + b) - mean_segment(h @ W + b) in one bf16 MXU pass
        # with f32 accumulation.
        d = jnp.dot(h_bf16, w_bf16, preferred_element_type=jnp.float32) + a[0]
        # f32 statistics path: per-node biased variance = E[d^2] via one
        # segmented-mean matmul (lane-aligned, no cancellation).
        var = jnp.dot(d * d, s_mean, preferred_element_type=jnp.float32)
        inv = jax.lax.rsqrt(var + LN_EPS)         # EUP
        return jnp.tanh(d * (inv * a[1]) + a[2])  # gamma/beta affine + tanh

    h = layer(x_ref[...].astype(jnp.bfloat16), w0_ref[...], aff_ref[0])
    for l in range(3):                            # layers 1..3 (D -> D)
        h = layer(h.astype(jnp.bfloat16), w_ref[l], aff_ref[l + 1])
    o_ref[...] = h.astype(o_ref.dtype)            # lane-dense store


def node_network_forward(x, params, *, out_dtype=None, tile_rows=TR_MAX):
    """x: [N, input_dim]; params: list of 4 dicts with w, b, gamma, beta."""
    n, d_in = x.shape
    d = params[0]["w"].shape[1]
    out_dtype = x.dtype if out_dtype is None else out_dtype

    # Lane packing: PACK nodes per 128-lane row. If 128 % d != 0 we fall back
    # to pack=1 (masked <128-lane stores -> perf cliff, still correct).
    pack = 128 // d if (d <= 128 and 128 % d == 0) else 1
    lanes = pack * d
    k0 = pack * d_in

    # ---- parameter packing (done once per call; cheap, shapes are tiny) ----
    eye_p = jnp.eye(pack, dtype=jnp.float32)
    s_mean = jnp.kron(eye_p, jnp.full((d, d), 1.0 / d, jnp.float32))   # (L, L)
    center = jnp.eye(lanes, dtype=jnp.float32) - s_mean                # I - S

    def centered_weight(w):
        w_bd = jnp.kron(eye_p, w.astype(jnp.float32))                  # block-diag
        return (w_bd @ center).astype(jnp.bfloat16)                    # centered

    w0_d = centered_weight(params[0]["w"])                             # (k0, L) bf16
    w_d = jnp.stack([centered_weight(params[i]["w"]) for i in (1, 2, 3)])

    def affine(p):
        b_t = jnp.tile(p["b"].reshape(-1).astype(jnp.float32), pack)
        return jnp.stack([b_t @ center,                                # centered bias
                          jnp.tile(p["gamma"].reshape(-1).astype(jnp.float32), pack),
                          jnp.tile(p["beta"].reshape(-1).astype(jnp.float32), pack)])
    aff = jnp.stack([affine(p) for p in params])                       # (4, 3, L) f32

    # ---- lane-pack the node dim and pick the tile / grid ----
    rows = pl.cdiv(n, pack)
    rows8 = ((rows + 7) // 8) * 8
    tr = min(tile_rows, rows8)
    n_steps = pl.cdiv(rows8, tr)
    if n_steps > 1 and n_steps % 2:
        # v7x megacore: give both TensorCores an even number of tiles.
        n_steps += 1
        tr = ((pl.cdiv(rows8, n_steps) + 7) // 8) * 8
        n_steps = pl.cdiv(rows8, tr)
        n_steps += n_steps % 2
    rows_pad = tr * n_steps
    n_pad = rows_pad * pack

    x_p = jnp.pad(x, ((0, n_pad - n), (0, 0)))
    x_packed = x_p.reshape(rows_pad, k0)          # free row-major reshape

    out_bytes = jnp.dtype(out_dtype).itemsize
    cost = pl.CostEstimate(
        # Executed MXU work: block-diag bf16 matmuls + 4 f32 stats matmuls.
        flops=2 * rows_pad * (k0 * lanes + 3 * lanes * lanes + 4 * lanes * lanes),
        transcendentals=8 * rows_pad * lanes,      # 4x tanh + 4x rsqrt
        bytes_accessed=(4 * rows_pad * k0 + out_bytes * rows_pad * lanes
                        + 2 * (k0 * lanes + 3 * lanes * lanes)
                        + 4 * (lanes * lanes + 12 * lanes)),
    )

    const2 = lambda i: (0, 0)
    const3 = lambda i: (0, 0, 0)

    out_packed = pl.pallas_call(
        _node_network_kernel,
        out_shape=jax.ShapeDtypeStruct((rows_pad, lanes), out_dtype),
        grid=(n_steps,),
        in_specs=[
            pl.BlockSpec((tr, k0), lambda i: (i, 0)),       # x tile (pipelined)
            pl.BlockSpec((k0, lanes), const2),              # W0 centered (resident)
            pl.BlockSpec((3, lanes, lanes), const3),        # W1..3 centered (resident)
            pl.BlockSpec((4, 3, lanes), const3),            # bias_d/gamma/beta
            pl.BlockSpec((lanes, lanes), const2),           # segmented-mean matrix
        ],
        out_specs=pl.BlockSpec((tr, lanes), lambda i: (i, 0)),  # lane-dense out
        compiler_params=pltpu.CompilerParams(
            dimension_semantics=("parallel",),              # megacore on v7x
            vmem_limit_bytes=32 * 1024 * 1024,              # explicit scoped limit
        ),
        cost_estimate=cost,
    )(x_packed, w0_d, w_d, aff, s_mean)

    # Free contiguous un-pack: [rows_pad, pack*d] -> [n_pad, d] -> [n, d]
    return out_packed.reshape(n_pad, d)[:n]


def init_params(key, input_dim, output_dim):
    """Deterministic synthetic parameters (shapes match the PyTorch module)."""
    sizes = [input_dim] + [output_dim] * 4
    params = []
    for i in range(4):
        key, kw, kb = jax.random.split(key, 3)
        bound = 1.0 / jnp.sqrt(sizes[i])
        w = jax.random.uniform(kw, (sizes[i], sizes[i + 1]),
                               minval=-bound, maxval=bound, dtype=jnp.float32)
        b = jax.random.uniform(kb, (1, sizes[i + 1]),
                               minval=-bound, maxval=bound, dtype=jnp.float32)
        gamma = jnp.ones((1, sizes[i + 1]), jnp.float32)
        beta = jnp.zeros((1, sizes[i + 1]), jnp.float32)
        params.append({"w": w, "b": b, "gamma": gamma, "beta": beta})
    return params


def node_network_reference(x, params):
    """Pure-JAX f32 reference of the same forward pass (correctness check)."""
    h = x
    for p in params:
        h = h @ p["w"] + p["b"]
        mu = jnp.mean(h, axis=-1, keepdims=True)
        var = jnp.mean((h - mu) ** 2, axis=-1, keepdims=True)
        h = (h - mu) / jnp.sqrt(var + LN_EPS)
        h = h * p["gamma"] + p["beta"]
        h = jnp.tanh(h)
    return h


if __name__ == "__main__":
    key = jax.random.PRNGKey(0)
    key, kx, kp = jax.random.split(key, 3)

    N = 64           # number of graph nodes (kept small for the smoke test)
    INPUT_DIM = 4    # node feature dim
    OUTPUT_DIM = 32  # hidden/output dim

    x = jax.random.normal(kx, (N, INPUT_DIM), dtype=jnp.float32)
    params = init_params(kp, INPUT_DIM, OUTPUT_DIM)

    fwd = jax.jit(node_network_forward)
    out = jax.block_until_ready(fwd(x, params))

    ref = node_network_reference(x, params)
    assert out.shape == (N, OUTPUT_DIM)
    # bf16 matmul inputs (f32 accumulate): expected rounding ~1e-3..1e-2 vs the
    # f32 reference, so the tolerance is loosened accordingly.
    assert jnp.allclose(out, ref, atol=5e-2, rtol=5e-2), float(
        jnp.max(jnp.abs(out - ref)))

    print("KERNEL_OK")
</pallas_src>

<mosaic_0001>
module attributes {stable_mosaic.version = 11 : i64} {
  func.func @_node_network_kernel(%arg0: i32, %arg1: memref<16x16xf32, #tpu.memory_space<vmem>>, %arg2: memref<16x128xbf16, #tpu.memory_space<vmem>>, %arg3: memref<3x128x128xbf16, #tpu.memory_space<vmem>>, %arg4: memref<4x3x128xf32, #tpu.memory_space<vmem>>, %arg5: memref<128x128xf32, #tpu.memory_space<vmem>>, %arg6: memref<16x128xf32, #tpu.memory_space<vmem>>) attributes {dimension_semantics = [#tpu.dimension_semantics<parallel>], iteration_bounds = array<i64: 1>, scalar_prefetch = 0 : i64, scratch_operands = 0 : i64, tpu.core_type = #tpu.core_type<tc>, window_params = [{transform_indices = @transform_0, window_bounds = array<i64: 16, 16>}, {pipeline_mode = #tpu.pipeline_mode<synchronous>, transform_indices = @transform_1, window_bounds = array<i64: 16, 128>}, {pipeline_mode = #tpu.pipeline_mode<synchronous>, transform_indices = @transform_2, window_bounds = array<i64: 3, 128, 128>}, {pipeline_mode = #tpu.pipeline_mode<synchronous>, transform_indices = @transform_3, window_bounds = array<i64: 4, 3, 128>}, {pipeline_mode = #tpu.pipeline_mode<synchronous>, transform_indices = @transform_4, window_bounds = array<i64: 128, 128>}, {transform_indices = @transform_5, window_bounds = array<i64: 16, 128>}]} {
    %c0 = arith.constant 0 : index
    %c0_0 = arith.constant 0 : index
    %0 = vector.load %arg5[%c0, %c0_0] : memref<128x128xf32, #tpu.memory_space<vmem>>, vector<128x128xf32>
    %c0_1 = arith.constant 0 : index
    %c0_2 = arith.constant 0 : index
    %1 = vector.load %arg1[%c0_1, %c0_2] : memref<16x16xf32, #tpu.memory_space<vmem>>, vector<16x16xf32>
    %2 = arith.truncf %1 : vector<16x16xf32> to vector<16x16xbf16>
    %c0_3 = arith.constant 0 : index
    %c0_4 = arith.constant 0 : index
    %3 = vector.load %arg2[%c0_3, %c0_4] : memref<16x128xbf16, #tpu.memory_space<vmem>>, vector<16x128xbf16>
    %c0_5 = arith.constant 0 : index
    %c0_6 = arith.constant 0 : index
    %c0_7 = arith.constant 0 : index
    %4 = vector.load %arg4[%c0_5, %c0_6, %c0_7] : memref<4x3x128xf32, #tpu.memory_space<vmem>>, vector<1x3x128xf32>
    %5 = vector.shape_cast %4 : vector<1x3x128xf32> to vector<3x128xf32>
    %cst = arith.constant dense<0.000000e+00> : vector<16x128xf32>
    %6 = tpu.matmul %2, %3, %cst {dimension_numbers = #tpu.dot_dimension_numbers<[1], [0], [0], [1], [0, 0, 1, 1], [], []>} : vector<16x16xbf16>, vector<16x128xbf16>, vector<16x128xf32> -> vector<16x128xf32>
    %7 = vector.extract_strided_slice %5 {offsets = [0, 0], sizes = [1, 128], strides = [1, 1]} : vector<3x128xf32> to vector<1x128xf32>
    %8 = vector.shape_cast %7 : vector<1x128xf32> to vector<128xf32>
    %9 = vector.shape_cast %8 : vector<128xf32> to vector<1x128xf32>
    %10 = vector.broadcast %9 : vector<1x128xf32> to vector<16x128xf32>
    %11 = arith.addf %6, %10 : vector<16x128xf32>
    %12 = arith.mulf %11, %11 : vector<16x128xf32>
    %cst_8 = arith.constant dense<0.000000e+00> : vector<16x128xf32>
    %13 = tpu.matmul %12, %0, %cst_8 {dimension_numbers = #tpu.dot_dimension_numbers<[1], [0], [0], [1], [0, 0, 1, 1], [], []>} : vector<16x128xf32>, vector<128x128xf32>, vector<16x128xf32> -> vector<16x128xf32>
    %cst_9 = arith.constant 9.99999974E-6 : f32
    %14 = vector.broadcast %cst_9 : f32 to vector<16x128xf32>
    %15 = arith.addf %13, %14 : vector<16x128xf32>
    %16 = math.rsqrt %15 : vector<16x128xf32>
    %17 = vector.extract_strided_slice %5 {offsets = [1, 0], sizes = [1, 128], strides = [1, 1]} : vector<3x128xf32> to vector<1x128xf32>
    %18 = vector.shape_cast %17 : vector<1x128xf32> to vector<128xf32>
    %19 = vector.shape_cast %18 : vector<128xf32> to vector<1x128xf32>
    %20 = vector.broadcast %19 : vector<1x128xf32> to vector<16x128xf32>
    %21 = arith.mulf %16, %20 : vector<16x128xf32>
    %22 = arith.mulf %11, %21 : vector<16x128xf32>
    %23 = vector.extract_strided_slice %5 {offsets = [2, 0], sizes = [1, 128], strides = [1, 1]} : vector<3x128xf32> to vector<1x128xf32>
    %24 = vector.shape_cast %23 : vector<1x128xf32> to vector<128xf32>
    %25 = vector.shape_cast %24 : vector<128xf32> to vector<1x128xf32>
    %26 = vector.broadcast %25 : vector<1x128xf32> to vector<16x128xf32>
    %27 = arith.addf %22, %26 : vector<16x128xf32>
    %28 = math.tanh %27 : vector<16x128xf32>
    %29 = arith.truncf %28 : vector<16x128xf32> to vector<16x128xbf16>
    %c0_10 = arith.constant 0 : index
    %c0_11 = arith.constant 0 : index
    %c0_12 = arith.constant 0 : index
    %30 = vector.load %arg3[%c0_10, %c0_11, %c0_12] : memref<3x128x128xbf16, #tpu.memory_space<vmem>>, vector<1x128x128xbf16>
    %31 = vector.shape_cast %30 : vector<1x128x128xbf16> to vector<128x128xbf16>
    %c1 = arith.constant 1 : index
    %c0_13 = arith.constant 0 : index
    %c0_14 = arith.constant 0 : index
    %32 = vector.load %arg4[%c1, %c0_13, %c0_14] : memref<4x3x128xf32, #tpu.memory_space<vmem>>, vector<1x3x128xf32>
    %33 = vector.shape_cast %32 : vector<1x3x128xf32> to vector<3x128xf32>
    %cst_15 = arith.constant dense<0.000000e+00> : vector<16x128xf32>
    %34 = tpu.matmul %29, %31, %cst_15 {dimension_numbers = #tpu.dot_dimension_numbers<[1], [0], [0], [1], [0, 0, 1, 1], [], []>} : vector<16x128xbf16>, vector<128x128xbf16>, vector<16x128xf32> -> vector<16x128xf32>
    %35 = vector.extract_strided_slice %33 {offsets = [0, 0], sizes = [1, 128], strides = [1, 1]} : vector<3x128xf32> to vector<1x128xf32>
    %36 = vector.shape_cast %35 : vector<1x128xf32> to vector<128xf32>
    %37 = vector.shape_cast %36 : vector<128xf32> to vector<1x128xf32>
    %38 = vector.broadcast %37 : vector<1x128xf32> to vector<16x128xf32>
    %39 = arith.addf %34, %38 : vector<16x128xf32>
    %40 = arith.mulf %39, %39 : vector<16x128xf32>
    %cst_16 = arith.constant dense<0.000000e+00> : vector<16x128xf32>
    %41 = tpu.matmul %40, %0, %cst_16 {dimension_numbers = #tpu.dot_dimension_numbers<[1], [0], [0], [1], [0, 0, 1, 1], [], []>} : vector<16x128xf32>, vector<128x128xf32>, vector<16x128xf32> -> vector<16x128xf32>
    %cst_17 = arith.constant 9.99999974E-6 : f32
    %42 = vector.broadcast %cst_17 : f32 to vector<16x128xf32>
    %43 = arith.addf %41, %42 : vector<16x128xf32>
    %44 = math.rsqrt %43 : vector<16x128xf32>
    %45 = vector.extract_strided_slice %33 {offsets = [1, 0], sizes = [1, 128], strides = [1, 1]} : vector<3x128xf32> to vector<1x128xf32>
    %46 = vector.shape_cast %45 : vector<1x128xf32> to vector<128xf32>
    %47 = vector.shape_cast %46 : vector<128xf32> to vector<1x128xf32>
    %48 = vector.broadcast %47 : vector<1x128xf32> to vector<16x128xf32>
    %49 = arith.mulf %44, %48 : vector<16x128xf32>
    %50 = arith.mulf %39, %49 : vector<16x128xf32>
    %51 = vector.extract_strided_slice %33 {offsets = [2, 0], sizes = [1, 128], strides = [1, 1]} : vector<3x128xf32> to vector<1x128xf32>
    %52 = vector.shape_cast %51 : vector<1x128xf32> to vector<128xf32>
    %53 = vector.shape_cast %52 : vector<128xf32> to vector<1x128xf32>
    %54 = vector.broadcast %53 : vector<1x128xf32> to vector<16x128xf32>
    %55 = arith.addf %50, %54 : vector<16x128xf32>
    %56 = math.tanh %55 : vector<16x128xf32>
    %57 = arith.truncf %56 : vector<16x128xf32> to vector<16x128xbf16>
    %c1_18 = arith.constant 1 : index
    %c0_19 = arith.constant 0 : index
    %c0_20 = arith.constant 0 : index
    %58 = vector.load %arg3[%c1_18, %c0_19, %c0_20] : memref<3x128x128xbf16, #tpu.memory_space<vmem>>, vector<1x128x128xbf16>
    %59 = vector.shape_cast %58 : vector<1x128x128xbf16> to vector<128x128xbf16>
    %c2 = arith.constant 2 : index
    %c0_21 = arith.constant 0 : index
    %c0_22 = arith.constant 0 : index
    %60 = vector.load %arg4[%c2, %c0_21, %c0_22] : memref<4x3x128xf32, #tpu.memory_space<vmem>>, vector<1x3x128xf32>
    %61 = vector.shape_cast %60 : vector<1x3x128xf32> to vector<3x128xf32>
    %cst_23 = arith.constant dense<0.000000e+00> : vector<16x128xf32>
    %62 = tpu.matmul %57, %59, %cst_23 {dimension_numbers = #tpu.dot_dimension_numbers<[1], [0], [0], [1], [0, 0, 1, 1], [], []>} : vector<16x128xbf16>, vector<128x128xbf16>, vector<16x128xf32> -> vector<16x128xf32>
    %63 = vector.extract_strided_slice %61 {offsets = [0, 0], sizes = [1, 128], strides = [1, 1]} : vector<3x128xf32> to vector<1x128xf32>
    %64 = vector.shape_cast %63 : vector<1x128xf32> to vector<128xf32>
    %65 = vector.shape_cast %64 : vector<128xf32> to vector<1x128xf32>
    %66 = vector.broadcast %65 : vector<1x128xf32> to vector<16x128xf32>
    %67 = arith.addf %62, %66 : vector<16x128xf32>
    %68 = arith.mulf %67, %67 : vector<16x128xf32>
    %cst_24 = arith.constant dense<0.000000e+00> : vector<16x128xf32>
    %69 = tpu.matmul %68, %0, %cst_24 {dimension_numbers = #tpu.dot_dimension_numbers<[1], [0], [0], [1], [0, 0, 1, 1], [], []>} : vector<16x128xf32>, vector<128x128xf32>, vector<16x128xf32> -> vector<16x128xf32>
    %cst_25 = arith.constant 9.99999974E-6 : f32
    %70 = vector.broadcast %cst_25 : f32 to vector<16x128xf32>
    %71 = arith.addf %69, %70 : vector<16x128xf32>
    %72 = math.rsqrt %71 : vector<16x128xf32>
    %73 = vector.extract_strided_slice %61 {offsets = [1, 0], sizes = [1, 128], strides = [1, 1]} : vector<3x128xf32> to vector<1x128xf32>
    %74 = vector.shape_cast %73 : vector<1x128xf32> to vector<128xf32>
    %75 = vector.shape_cast %74 : vector<128xf32> to vector<1x128xf32>
    %76 = vector.broadcast %75 : vector<1x128xf32> to vector<16x128xf32>
    %77 = arith.mulf %72, %76 : vector<16x128xf32>
    %78 = arith.mulf %67, %77 : vector<16x128xf32>
    %79 = vector.extract_strided_slice %61 {offsets = [2, 0], sizes = [1, 128], strides = [1, 1]} : vector<3x128xf32> to vector<1x128xf32>
    %80 = vector.shape_cast %79 : vector<1x128xf32> to vector<128xf32>
    %81 = vector.shape_cast %80 : vector<128xf32> to vector<1x128xf32>
    %82 = vector.broadcast %81 : vector<1x128xf32> to vector<16x128xf32>
    %83 = arith.addf %78, %82 : vector<16x128xf32>
    %84 = math.tanh %83 : vector<16x128xf32>
    %85 = arith.truncf %84 : vector<16x128xf32> to vector<16x128xbf16>
    %c2_26 = arith.constant 2 : index
    %c0_27 = arith.constant 0 : index
    %c0_28 = arith.constant 0 : index
    %86 = vector.load %arg3[%c2_26, %c0_27, %c0_28] : memref<3x128x128xbf16, #tpu.memory_space<vmem>>, vector<1x128x128xbf16>
    %87 = vector.shape_cast %86 : vector<1x128x128xbf16> to vector<128x128xbf16>
    %c3 = arith.constant 3 : index
    %c0_29 = arith.constant 0 : index
    %c0_30 = arith.constant 0 : index
    %88 = vector.load %arg4[%c3, %c0_29, %c0_30] : memref<4x3x128xf32, #tpu.memory_space<vmem>>, vector<1x3x128xf32>
    %89 = vector.shape_cast %88 : vector<1x3x128xf32> to vector<3x128xf32>
    %cst_31 = arith.constant dense<0.000000e+00> : vector<16x128xf32>
    %90 = tpu.matmul %85, %87, %cst_31 {dimension_numbers = #tpu.dot_dimension_numbers<[1], [0], [0], [1], [0, 0, 1, 1], [], []>} : vector<16x128xbf16>, vector<128x128xbf16>, vector<16x128xf32> -> vector<16x128xf32>
    %91 = vector.extract_strided_slice %89 {offsets = [0, 0], sizes = [1, 128], strides = [1, 1]} : vector<3x128xf32> to vector<1x128xf32>
    %92 = vector.shape_cast %91 : vector<1x128xf32> to vector<128xf32>
    %93 = vector.shape_cast %92 : vector<128xf32> to vector<1x128xf32>
    %94 = vector.broadcast %93 : vector<1x128xf32> to vector<16x128xf32>
    %95 = arith.addf %90, %94 : vector<16x128xf32>
    %96 = arith.mulf %95, %95 : vector<16x128xf32>
    %cst_32 = arith.constant dense<0.000000e+00> : vector<16x128xf32>
    %97 = tpu.matmul %96, %0, %cst_32 {dimension_numbers = #tpu.dot_dimension_numbers<[1], [0], [0], [1], [0, 0, 1, 1], [], []>} : vector<16x128xf32>, vector<128x128xf32>, vector<16x128xf32> -> vector<16x128xf32>
    %cst_33 = arith.constant 9.99999974E-6 : f32
    %98 = vector.broadcast %cst_33 : f32 to vector<16x128xf32>
    %99 = arith.addf %97, %98 : vector<16x128xf32>
    %100 = math.rsqrt %99 : vector<16x128xf32>
    %101 = vector.extract_strided_slice %89 {offsets = [1, 0], sizes = [1, 128], strides = [1, 1]} : vector<3x128xf32> to vector<1x128xf32>
    %102 = vector.shape_cast %101 : vector<1x128xf32> to vector<128xf32>
    %103 = vector.shape_cast %102 : vector<128xf32> to vector<1x128xf32>
    %104 = vector.broadcast %103 : vector<1x128xf32> to vector<16x128xf32>
    %105 = arith.mulf %100, %104 : vector<16x128xf32>
    %106 = arith.mulf %95, %105 : vector<16x128xf32>
    %107 = vector.extract_strided_slice %89 {offsets = [2, 0], sizes = [1, 128], strides = [1, 1]} : vector<3x128xf32> to vector<1x128xf32>
    %108 = vector.shape_cast %107 : vector<1x128xf32> to vector<128xf32>
    %109 = vector.shape_cast %108 : vector<128xf32> to vector<1x128xf32>
    %110 = vector.broadcast %109 : vector<1x128xf32> to vector<16x128xf32>
    %111 = arith.addf %106, %110 : vector<16x128xf32>
    %112 = math.tanh %111 : vector<16x128xf32>
    %c0_34 = arith.constant 0 : index
    %c0_35 = arith.constant 0 : index
    %113 = vector.load %arg6[%c0_34, %c0_35] : memref<16x128xf32, #tpu.memory_space<vmem>>, vector<16x128xf32>
    tpu.vector_store %arg6[%c0_34, %c0_35], %112 {strides = array<i32>} : memref<16x128xf32, #tpu.memory_space<vmem>>, vector<16x128xf32>,
    return
  }
  func.func @transform_0(%arg0: i32) -> (i32, i32) {
    %c0_i32 = arith.constant 0 : i32
    %c0_i32_0 = arith.constant 0 : i32
    return %arg0, %c0_i32 : i32, i32
  }
  func.func @transform_1(%arg0: i32) -> (i32, i32) {
    %c0_i32 = arith.constant 0 : i32
    %c0_i32_0 = arith.constant 0 : i32
    %c0_i32_1 = arith.constant 0 : i32
    return %c0_i32, %c0_i32_0 : i32, i32
  }
  func.func @transform_2(%arg0: i32) -> (i32, i32, i32) {
    %c0_i32 = arith.constant 0 : i32
    %c0_i32_0 = arith.constant 0 : i32
    %c0_i32_1 = arith.constant 0 : i32
    %c0_i32_2 = arith.constant 0 : i32
    return %c0_i32, %c0_i32_0, %c0_i32_1 : i32, i32, i32
  }
  func.func @transform_3(%arg0: i32) -> (i32, i32, i32) {
    %c0_i32 = arith.constant 0 : i32
    %c0_i32_0 = arith.constant 0 : i32
    %c0_i32_1 = arith.constant 0 : i32
    %c0_i32_2 = arith.constant 0 : i32
    return %c0_i32, %c0_i32_0, %c0_i32_1 : i32, i32, i32
  }
  func.func @transform_4(%arg0: i32) -> (i32, i32) {
    %c0_i32 = arith.constant 0 : i32
    %c0_i32_0 = arith.constant 0 : i32
    %c0_i32_1 = arith.constant 0 : i32
    return %c0_i32, %c0_i32_0 : i32, i32
  }
  func.func @transform_5(%arg0: i32) -> (i32, i32) {
    %c0_i32 = arith.constant 0 : i32
    %c0_i32_0 = arith.constant 0 : i32
    return %arg0, %c0_i32 : i32, i32
  }
}

</mosaic_0001>

<llo_original>
// kernel: tile.81
$region0: #{tile.81}
  #allocation0 [shape = 's32[1]{0}', space=sflag, size = 0x4, scoped, tag = 'scoped memory for tile.81']
  %s0 = inlined_call_operand.vmem [shape: f32[32], index: 0, kind: input, shape index: {}]
  %s1 = inlined_call_operand.vmem [shape: f32[4,32], index: 1, kind: output, shape index: {}]
  // Predicated region
  $region2: #{tile.81} parent=0 // pred_check
    _
  $region3: #{tile.81} parent=0 // pred_check_branch
    %3 = sbr.rel (0) target = $region5
  $region4: #{tile.81} parent=0 // pred_region
    _
  $region5: #{tile.81} parent=0 // pred_fallthru
    _
  %v4 = vld [vmem:[%s0] ss:$0 sm:$0xff]
  %5 = vst [vmem:[%s1] sm:$0xf] %v4

// kernel: tile.83
$region0: #{tile.83}
  %s0 = inlined_call_operand.vmem [shape: f32[4,32], index: 0, kind: input, shape index: {}]
  %s1 = inlined_call_operand.vmem [shape: f32[1,128], index: 1, kind: output, shape index: {}]
  $region1: #{tile.83} parent=0
    #allocation0 [shape = 'u8[4096]{0}', space=vmem, size = 0x1000, scoped, tag = 'scoped mem for output reshape']
    #allocation1 [shape = 'u8[4096]{0}', space=vmem, size = 0x1000, scoped, tag = 'scoped mem for input reshape']
    %s3 = sshll.u32 1, 4
    %s4 = ssub.s32 %s3, 1
    %v5 = vld [vmem:[%s0] sm:%s4]
    %6 = vst [vmem:[#allocation1] sm:%s4] %v5
    %v7 = vld [vmem:[#allocation1] sm:$0x1]
    %vm8 = vcmask 261120
    %9 = vst.msk [vmem:[#allocation0] sm:$0x1] %vm8, %v7
    %s10 = scalar_lea.vmem [#allocation1], 3
    %v11 = vld [vmem:[%s10] sm:$0x1]
    %12 = vrot.lane.b32.xlu0 %v11, 96
    %v13 = vpop.permute.xlu0 %12
    %vm14 = vcmask 1048320
    %15 = vst.msk [vmem:[#allocation0] sm:$0x1] %vm14, %v13
    %s16 = scalar_lea.vmem [#allocation1], 2
    %v17 = vld [vmem:[%s16] sm:$0x1]
    %18 = vrot.lane.b32.xlu0 %v17, 64
    %v19 = vpop.permute.xlu0 %18
    %vm20 = vcmask 785920
    %21 = vst.msk [vmem:[#allocation0] sm:$0x1] %vm20, %v19
    %s22 = scalar_lea.vmem [#allocation1], 1
    %v23 = vld [vmem:[%s22] sm:$0x1]
    %24 = vrot.lane.b32.xlu0 %v23, 32
    %v25 = vpop.permute.xlu0 %24
    %vm26 = vcmask 523520
    %27 = vst.msk [vmem:[#allocation0] sm:$0x1] %vm26, %v25
    %s29 = sshll.u32 1, 1
    %s30 = ssub.s32 %s29, 1
    %v32 = vld [vmem:[#allocation0] sm:%s30]
    %s33 = sshll.u32 1, 1
    %s34 = ssub.s32 %s33, 1
    %35 = vst [vmem:[%s1] sm:%s34] %v32

// kernel: tile.51
$region0: #{tile.51}
  %s0 = inlined_call_operand.vmem [shape: f32[4,32], index: 0, kind: input, shape index: {}]
  %s1 = inlined_call_operand.vmem [shape: f32[128], index: 1, kind: output, shape index: {}]
  $region1: #{tile.51} parent=0
    #allocation0 [shape = 'u8[4096]{0}', space=vmem, size = 0x1000, scoped, tag = 'scoped mem for output reshape']
    #allocation1 [shape = 'u8[4096]{0}', space=vmem, size = 0x1000, scoped, tag = 'scoped mem for input reshape']
    %s3 = sshll.u32 1, 4
    %s4 = ssub.s32 %s3, 1
    %v5 = vld [vmem:[%s0] sm:%s4]
    %6 = vst [vmem:[#allocation1] sm:%s4] %v5
    %v7 = vld [vmem:[#allocation1] sm:$0x1]
    %vm8 = vcmask 261120
    %9 = vst.msk [vmem:[#allocation0] sm:$0x1] %vm8, %v7
    %s10 = scalar_lea.vmem [#allocation1], 3
    %v11 = vld [vmem:[%s10] sm:$0x1]
    %12 = vrot.lane.b32.xlu0 %v11, 96
    %v13 = vpop.permute.xlu0 %12
    %vm14 = vcmask 1048320
    %15 = vst.msk [vmem:[#allocation0] sm:$0x1] %vm14, %v13
    %s16 = scalar_lea.vmem [#allocation1], 2
    %v17 = vld [vmem:[%s16] sm:$0x1]
    %18 = vrot.lane.b32.xlu0 %v17, 64
    %v19 = vpop.permute.xlu0 %18
    %vm20 = vcmask 785920
    %21 = vst.msk [vmem:[#allocation0] sm:$0x1] %vm20, %v19
    %s22 = scalar_lea.vmem [#allocation1], 1
    %v23 = vld [vmem:[%s22] sm:$0x1]
    %24 = vrot.lane.b32.xlu0 %v23, 32
    %v25 = vpop.permute.xlu0 %24
    %vm26 = vcmask 523520
    %27 = vst.msk [vmem:[#allocation0] sm:$0x1] %vm26, %v25
    %s29 = sshll.u32 1, 1
    %s30 = ssub.s32 %s29, 1
    %v32 = vld [vmem:[#allocation0] sm:%s30]
    %s33 = sshll.u32 1, 1
    %s34 = ssub.s32 %s33, 1
    %35 = vst [vmem:[%s1] sm:%s34] %v32

// kernel: node_network_forward.1
$region0: #{node_network_forward.1}
  #allocation0 [shape = 'u32[]', space=smem, size = 0x4, offset = 0x4, fixed_abs, tag = 'smem constant byte address 0x4 - core index']
  #allocation1 [shape = 'u32[144,128]{1,0:T(1,128)}', space=vmem, size = 0x12000, scoped, tag = 'internal scratch']
  %s0 = inlined_call_operand.vmem [shape: f32[16,16], index: 0, kind: input, shape index: {}]
  %s1 = inlined_call_operand.vmem [shape: bf16[16,128], index: 1, kind: input, shape index: {}]
  %s2 = inlined_call_operand.vmem [shape: bf16[3,128,128], index: 2, kind: input, shape index: {}]
  %s3 = inlined_call_operand.vmem [shape: f32[4,3,128], index: 3, kind: input, shape index: {}]
  %s4 = inlined_call_operand.vmem [shape: f32[128,128], index: 4, kind: input, shape index: {}]
  %s5 = inlined_call_operand.vmem [shape: f32[16,128], index: 5, kind: output, shape index: {}]
  %s6 = sld [smem:[#allocation0]]
  $region30: #{node_network_forward.1} parent=0
    _
  %s8 = ssub.s32 1, %s6
  %s9 = scalar_select 0, %s8, %s6
  // Predicated region
  $region2: #{node_network_forward.1} parent=0 // pred_check
    _
  $region3: #{node_network_forward.1} parent=0 // pred_check_branch
    %11 = sbr.rel (0) target = $region5
  $region4: #{node_network_forward.1} parent=0 // pred_region
    _
  $region5: #{node_network_forward.1} parent=0 // pred_fallthru
    _
  // Predicated region
  $region6: #{node_network_forward.1} parent=0 // pred_check
    _
  $region7: #{node_network_forward.1} parent=0 // pred_check_branch
    %13 = sbr.rel (0) target = $region9
  $region8: #{node_network_forward.1} parent=0 // pred_region
    _
  $region9: #{node_network_forward.1} parent=0 // pred_fallthru
    _
  // Predicated region
  $region10: #{node_network_forward.1} parent=0 // pred_check
    _
  $region11: #{node_network_forward.1} parent=0 // pred_check_branch
    %15 = sbr.rel (0) target = $region13
  $region12: #{node_network_forward.1} parent=0 // pred_region
    _
  $region13: #{node_network_forward.1} parent=0 // pred_fallthru
    _
  // Predicated region
  $region14: #{node_network_forward.1} parent=0 // pred_check
    _
  $region15: #{node_network_forward.1} parent=0 // pred_check_branch
    %17 = sbr.rel (0) target = $region17
  $region16: #{node_network_forward.1} parent=0 // pred_region
    _
  $region17: #{node_network_forward.1} parent=0 // pred_fallthru
    _
  // Predicated region
  $region18: #{node_network_forward.1} parent=0 // pred_check
    _
  $region19: #{node_network_forward.1} parent=0 // pred_check_branch
    %19 = sbr.rel (0) target = $region21
  $region20: #{node_network_forward.1} parent=0 // pred_region
    _
  $region21: #{node_network_forward.1} parent=0 // pred_fallthru
    _
  %v21 = vld [vmem:[%s4] sm:$0xff]
  %v22 = vld [vmem:[%s4 + $0x8] sm:$0xff]
  %v23 = vld [vmem:[%s4 + $0x10] sm:$0xff]
  %v24 = vld [vmem:[%s4 + $0x18] sm:$0xff]
  %v25 = vld [vmem:[%s4 + $0x20] sm:$0xff]
  %v26 = vld [vmem:[%s4 + $0x28] sm:$0xff]
  %v27 = vld [vmem:[%s4 + $0x30] sm:$0xff]
  %v28 = vld [vmem:[%s4 + $0x38] sm:$0xff]
  %v29 = vld [vmem:[%s4 + $0x40] sm:$0xff]
  %v30 = vld [vmem:[%s4 + $0x48] sm:$0xff]
  %v31 = vld [vmem:[%s4 + $0x50] sm:$0xff]
  %v32 = vld [vmem:[%s4 + $0x58] sm:$0xff]
  %v33 = vld [vmem:[%s4 + $0x60] sm:$0xff]
  %v34 = vld [vmem:[%s4 + $0x68] sm:$0xff]
  %v35 = vld [vmem:[%s4 + $0x70] sm:$0xff]
  %v36 = vld [vmem:[%s4 + $0x78] sm:$0xff]
  %v37 = vld [vmem:[%s0] sm:$0xff]
  %v38 = vld [vmem:[%s0 + $0x8] sm:$0xff]
  %v39 = vpack.c.bf16 %v38, %v37
  %v40 = vld [vmem:[%s1] sm:$0xf]
  %v41 = vld [vmem:[%s1 + $0x4] sm:$0xf]
  %v42 = vld [vmem:[%s3] sm:$0x7]
  %v43 = vlaneseq
  %v44 = vshrl.u32 %v43, 7
  %v45 = vsub.s32 0, %v44
  %v46 = vrot.slane %v42, %v45
  %v49 = vunpack.c.l.b16 %v40
  %v50 = vunpack.c.l.b16 %v41
  %v51 = vpack.c.b16 %v50, %v49
  %vm53 = vcmask 130048
  %v55 = vsel %vm53, %v39, 0
  %57 = vmatprep.subr.bf16.mxu0 0
  %58 = vmatpush1.bf16.msra.mxu0 0
  %59 = vmatprep.subr.bf16.mxu0 0
  %60 = vmatpush1.bf16.msra.mxu0 0
  %61 = vmatprep.subr.bf16.mxu0 0
  %62 = vmatpush1.bf16.msra.mxu0 0
  %63 = vmatprep.subr.bf16.mxu0 0
  %64 = vmatpush1.bf16.msra.mxu0 0
  %65 = vmatprep.subr.bf16.mxu0 0
  %66 = vmatpush1.bf16.msra.mxu0 0
  %67 = vmatprep.subr.bf16.mxu0 0
  %68 = vmatpush1.bf16.msra.mxu0 0
  %69 = vmatprep.subr.bf16.mxu0 0
  %70 = vmatpush1.bf16.msra.mxu0 0
  %71 = vmatprep.subr.bf16.mxu0 0
  %72 = vmatpush1.bf16.msra.mxu0 %v51
  %73 = vmatprep.subr.bf16.mxu0 0
  %74 = vmatpush2.bf16.msra.mxu0 0
  %75 = vmatprep.subr.bf16.mxu0 0
  %76 = vmatpush2.bf16.msra.mxu0 0
  %77 = vmatprep.subr.bf16.mxu0 0
  %78 = vmatpush2.bf16.msra.mxu0 0
  %79 = vmatprep.subr.bf16.mxu0 0
  %80 = vmatpush2.bf16.msra.mxu0 0
  %81 = vmatprep.subr.bf16.mxu0 0
  %82 = vmatpush2.bf16.msra.mxu0 0
  %83 = vmatprep.subr.bf16.mxu0 0
  %84 = vmatpush2.bf16.msra.mxu0 0
  %85 = vmatprep.subr.bf16.mxu0 0
  %86 = vmatpush2.bf16.msra.mxu0 0
  %87 = vmatprep.subr.bf16.mxu0 0
  %88 = vmatpush2.bf16.msra.mxu0 0
  %89 = vmatprep.mubr.bf16.mxu0 0
  %90 = vmatmul.mubr.bf16.gmra.mxu0 %v55
  %v91 = vpop.f32.mrf.mxu0
  %v92 = vadd.f32 %v46, %v91
  %v93 = vpop.f32.mrf.mxu0
  %v94 = vpop.f32.mrf.mxu0
  %v95 = vadd.f32 %v46, %v94
  %v96 = vpop.f32.mrf.mxu0
  %97 = vdwg.mxu0
  %v98 = vmul.f32 %v92, %v92
  %v99 = vmul.f32 %v95, %v95
  %100 = vmatprep.subr.mxu0 0.0
  %101 = vmatpush1.msra.mxu0 %v36
  %102 = vmatprep.subr.mxu0 0.0
  %103 = vmatpush1.msra.mxu0 %v35
  %104 = vmatprep.subr.mxu0 0.0
  %105 = vmatpush1.msra.mxu0 %v34
  %106 = vmatprep.subr.mxu0 0.0
  %107 = vmatpush1.msra.mxu0 %v33
  %108 = vmatprep.subr.mxu0 0.0
  %109 = vmatpush1.msra.mxu0 %v32
  %110 = vmatprep.subr.mxu0 0.0
  %111 = vmatpush1.msra.mxu0 %v31
  %112 = vmatprep.subr.mxu0 0.0
  %113 = vmatpush1.msra.mxu0 %v30
  %114 = vmatprep.subr.mxu0 0.0
  %115 = vmatpush1.msra.mxu0 %v29
  %116 = vmatprep.subr.mxu0 0.0
  %117 = vmatpush1.msra.mxu0 %v28
  %118 = vmatprep.subr.mxu0 0.0
  %119 = vmatpush1.msra.mxu0 %v27
  %120 = vmatprep.subr.mxu0 0.0
  %121 = vmatpush1.msra.mxu0 %v26
  %122 = vmatprep.subr.mxu0 0.0
  %123 = vmatpush1.msra.mxu0 %v25
  %124 = vmatprep.subr.mxu0 0.0
  %125 = vmatpush1.msra.mxu0 %v24
  %126 = vmatprep.subr.mxu0 0.0
  %127 = vmatpush1.msra.mxu0 %v23
  %128 = vmatprep.subr.mxu0 0.0
  %129 = vmatpush1.msra.mxu0 %v22
  %130 = vmatprep.subr.mxu0 0.0
  %131 = vmatpush1.msra.mxu0 %v21
  %132 = vmatprep.subr.mxu0 0.0
  %133 = vmatpush2.msra.mxu0 0.0
  %134 = vmatprep.subr.mxu0 0.0
  %135 = vmatpush2.msra.mxu0 0.0
  %136 = vmatprep.subr.mxu0 0.0
  %137 = vmatpush2.msra.mxu0 0.0
  %138 = vmatprep.subr.mxu0 0.0
  %139 = vmatpush2.msra.mxu0 0.0
  %140 = vmatprep.subr.mxu0 0.0
  %141 = vmatpush2.msra.mxu0 0.0
  %142 = vmatprep.subr.mxu0 0.0
  %143 = vmatpush2.msra.mxu0 0.0
  %144 = vmatprep.subr.mxu0 0.0
  %145 = vmatpush2.msra.mxu0 0.0
  %146 = vmatprep.subr.mxu0 0.0
  %147 = vmatpush2.msra.mxu0 0.0
  %148 = vmatprep.subr.mxu0 0.0
  %149 = vmatpush2.msra.mxu0 0.0
  %150 = vmatprep.subr.mxu0 0.0
  %151 = vmatpush2.msra.mxu0 0.0
  %152 = vmatprep.subr.mxu0 0.0
  %153 = vmatpush2.msra.mxu0 0.0
  %154 = vmatprep.subr.mxu0 0.0
  %155 = vmatpush2.msra.mxu0 0.0
  %156 = vmatprep.subr.mxu0 0.0
  %157 = vmatpush2.msra.mxu0 0.0
  %158 = vmatprep.subr.mxu0 0.0
  %159 = vmatpush2.msra.mxu0 0.0
  %160 = vmatprep.subr.mxu0 0.0
  %161 = vmatpush2.msra.mxu0 0.0
  %162 = vmatprep.subr.mxu0 0.0
  %163 = vmatpush2.msra.mxu0 0.0
  %164 = vmatprep.mubr.f32.mxu0 0.0
  %165 = vmatmul.mubr.f32.gmra.mxu0 %v98
  %v166 = vpop.f32.mrf.mxu0
  %v167 = vadd.f32 1e-05, %v166
  %v168 = vpop.f32.mrf.mxu0
  %169 = vmatprep.mubr.f32.mxu0 0.0
  %170 = vmatmul.mubr.f32.gmra.mxu0 %v99
  %v171 = vpop.f32.mrf.mxu0
  %v172 = vadd.f32 1e-05, %v171
  %v173 = vpop.f32.mrf.mxu0
  %174 = vdwg.mxu0
  %v175 = vrsqrt.pop %v167
  %v176 = vrsqrt.pop %v172
  %v177 = vlaneseq
  %v178 = vshrl.u32 %v177, 7
  %v179 = vsub.s32 1, %v178
  %v180 = vrot.slane %v42, %v179
  %v181 = vmul.f32 %v175, %v180
  %v182 = vmul.f32 %v176, %v180
  %v183 = vmul.f32 %v92, %v181
  %v184 = vmul.f32 %v95, %v182
  %v185 = vlaneseq
  %v186 = vshrl.u32 %v185, 7
  %v187 = vsub.s32 2, %v186
  %v188 = vrot.slane %v42, %v187
  %v189 = vadd.f32 %v183, %v188
  %v190 = vadd.f32 %v184, %v188
  %v191 = vtanh.pop %v189
  %v192 = vtanh.pop %v190
  %v193 = vpack.c.bf16 %v192, %v191
  %v194 = vld [vmem:[%s2] sm:$0xf]
  %v195 = vld [vmem:[%s2 + $0x4] sm:$0xf]
  %v196 = vld [vmem:[%s2 + $0x8] sm:$0xf]
  %v197 = vld [vmem:[%s2 + $0xc] sm:$0xf]
  %v198 = vld [vmem:[%s2 + $0x10] sm:$0xf]
  %v199 = vld [vmem:[%s2 + $0x14] sm:$0xf]
  %v200 = vld [vmem:[%s2 + $0x18] sm:$0xf]
  %v201 = vld [vmem:[%s2 + $0x1c] sm:$0xf]
  %v202 = vld [vmem:[%s2 + $0x20] sm:$0xf]
  %v203 = vld [vmem:[%s2 + $0x24] sm:$0xf]
  %v204 = vld [vmem:[%s2 + $0x28] sm:$0xf]
  %v205 = vld [vmem:[%s2 + $0x2c] sm:$0xf]
  %v206 = vld [vmem:[%s2 + $0x30] sm:$0xf]
  %v207 = vld [vmem:[%s2 + $0x34] sm:$0xf]
  %v208 = vld [vmem:[%s2 + $0x38] sm:$0xf]
  %v209 = vld [vmem:[%s2 + $0x3c] sm:$0xf]
  %s210 = scalar_lea.vmem %s3, 4
  %v211 = vld [vmem:[%s210] sm:$0x7]
  %v212 = vlaneseq
  %v213 = vshrl.u32 %v212, 7
  %v214 = vsub.s32 0, %v213
  %v215 = vrot.slane %v211, %v214
  %v232 = vunpack.c.l.b16 %v194
  %v233 = vunpack.c.l.b16 %v195
  %v234 = vunpack.c.l.b16 %v196
  %v235 = vunpack.c.l.b16 %v197
  %v236 = vunpack.c.l.b16 %v198
  %v237 = vunpack.c.l.b16 %v199
  %v238 = vunpack.c.l.b16 %v200
  %v239 = vunpack.c.l.b16 %v201
  %v240 = vunpack.c.l.b16 %v202
  %v241 = vunpack.c.l.b16 %v203
  %v242 = vunpack.c.l.b16 %v204
  %v243 = vunpack.c.l.b16 %v205
  %v244 = vunpack.c.l.b16 %v206
  %v245 = vunpack.c.l.b16 %v207
  %v246 = vunpack.c.l.b16 %v208
  %v247 = vunpack.c.l.b16 %v209
  %v248 = vpack.c.b16 %v233, %v232
  %v249 = vpack.c.b16 %v235, %v234
  %v250 = vpack.c.b16 %v237, %v236
  %v251 = vpack.c.b16 %v239, %v238
  %v252 = vpack.c.b16 %v241, %v240
  %v253 = vpack.c.b16 %v243, %v242
  %v254 = vpack.c.b16 %v245, %v244
  %v255 = vpack.c.b16 %v247, %v246
  %264 = vmatprep.subr.bf16.mxu0 0
  %265 = vmatpush1.bf16.msra.mxu0 %v255
  %266 = vmatprep.subr.bf16.mxu0 0
  %267 = vmatpush1.bf16.msra.mxu0 %v254
  %268 = vmatprep.subr.bf16.mxu0 0
  %269 = vmatpush1.bf16.msra.mxu0 %v253
  %270 = vmatprep.subr.bf16.mxu0 0
  %271 = vmatpush1.bf16.msra.mxu0 %v252
  %272 = vmatprep.subr.bf16.mxu0 0
  %273 = vmatpush1.bf16.msra.mxu0 %v251
  %274 = vmatprep.subr.bf16.mxu0 0
  %275 = vmatpush1.bf16.msra.mxu0 %v250
  %276 = vmatprep.subr.bf16.mxu0 0
  %277 = vmatpush1.bf16.msra.mxu0 %v249
  %278 = vmatprep.subr.bf16.mxu0 0
  %279 = vmatpush1.bf16.msra.mxu0 %v248
  %280 = vmatprep.subr.bf16.mxu0 0
  %281 = vmatpush2.bf16.msra.mxu0 0
  %282 = vmatprep.subr.bf16.mxu0 0
  %283 = vmatpush2.bf16.msra.mxu0 0
  %284 = vmatprep.subr.bf16.mxu0 0
  %285 = vmatpush2.bf16.msra.mxu0 0
  %286 = vmatprep.subr.bf16.mxu0 0
  %287 = vmatpush2.bf16.msra.mxu0 0
  %288 = vmatprep.subr.bf16.mxu0 0
  %289 = vmatpush2.bf16.msra.mxu0 0
  %290 = vmatprep.subr.bf16.mxu0 0
  %291 = vmatpush2.bf16.msra.mxu0 0
  %292 = vmatprep.subr.bf16.mxu0 0
  %293 = vmatpush2.bf16.msra.mxu0 0
  %294 = vmatprep.subr.bf16.mxu0 0
  %295 = vmatpush2.bf16.msra.mxu0 0
  %296 = vmatprep.mubr.bf16.mxu0 0
  %297 = vmatmul.mubr.bf16.gmra.mxu0 %v193
  %v298 = vpop.f32.mrf.mxu0
  %v299 = vadd.f32 %v215, %v298
  %v300 = vpop.f32.mrf.mxu0
  %v301 = vpop.f32.mrf.mxu0
  %v302 = vadd.f32 %v215, %v301
  %v303 = vpop.f32.mrf.mxu0
  %304 = vdwg.mxu0
  %v305 = vmul.f32 %v299, %v299
  %v306 = vmul.f32 %v302, %v302
  %307 = vmatprep.subr.mxu0 0.0
  %308 = vmatpush1.msra.mxu0 %v36
  %309 = vmatprep.subr.mxu0 0.0
  %310 = vmatpush1.msra.mxu0 %v35
  %311 = vmatprep.subr.mxu0 0.0
  %312 = vmatpush1.msra.mxu0 %v34
  %313 = vmatprep.subr.mxu0 0.0
  %314 = vmatpush1.msra.mxu0 %v33
  %315 = vmatprep.subr.mxu0 0.0
  %316 = vmatpush1.msra.mxu0 %v32
  %317 = vmatprep.subr.mxu0 0.0
  %318 = vmatpush1.msra.mxu0 %v31
  %319 = vmatprep.subr.mxu0 0.0
  %320 = vmatpush1.msra.mxu0 %v30
  %321 = vmatprep.subr.mxu0 0.0
  %322 = vmatpush1.msra.mxu0 %v29
  %323 = vmatprep.subr.mxu0 0.0
  %324 = vmatpush1.msra.mxu0 %v28
  %325 = vmatprep.subr.mxu0 0.0
  %326 = vmatpush1.msra.mxu0 %v27
  %327 = vmatprep.subr.mxu0 0.0
  %328 = vmatpush1.msra.mxu0 %v26
  %329 = vmatprep.subr.mxu0 0.0
  %330 = vmatpush1.msra.mxu0 %v25
  %331 = vmatprep.subr.mxu0 0.0
  %332 = vmatpush1.msra.mxu0 %v24
  %333 = vmatprep.subr.mxu0 0.0
  %334 = vmatpush1.msra.mxu0 %v23
  %335 = vmatprep.subr.mxu0 0.0
  %336 = vmatpush1.msra.mxu0 %v22
  %337 = vmatprep.subr.mxu0 0.0
  %338 = vmatpush1.msra.mxu0 %v21
  %339 = vmatprep.subr.mxu0 0.0
  %340 = vmatpush2.msra.mxu0 0.0
  %341 = vmatprep.subr.mxu0 0.0
  %342 = vmatpush2.msra.mxu0 0.0
  %343 = vmatprep.subr.mxu0 0.0
  %344 = vmatpush2.msra.mxu0 0.0
  %345 = vmatprep.subr.mxu0 0.0
  %346 = vmatpush2.msra.mxu0 0.0
  %347 = vmatprep.subr.mxu0 0.0
  %348 = vmatpush2.msra.mxu0 0.0
  %349 = vmatprep.subr.mxu0 0.0
  %350 = vmatpush2.msra.mxu0 0.0
  %351 = vmatprep.subr.mxu0 0.0
  %352 = vmatpush2.msra.mxu0 0.0
  %353 = vmatprep.subr.mxu0 0.0
  %354 = vmatpush2.msra.mxu0 0.0
  %355 = vmatprep.subr.mxu0 0.0
  %356 = vmatpush2.msra.mxu0 0.0
  %357 = vmatprep.subr.mxu0 0.0
  %358 = vmatpush2.msra.mxu0 0.0
  %359 = vmatprep.subr.mxu0 0.0
  %360 = vmatpush2.msra.mxu0 0.0
  %361 = vmatprep.subr.mxu0 0.0
  %362 = vmatpush2.msra.mxu0 0.0
  %363 = vmatprep.subr.mxu0 0.0
  %364 = vmatpush2.msra.mxu0 0.0
  %365 = vmatprep.subr.mxu0 0.0
  %366 = vmatpush2.msra.mxu0 0.0
  %367 = vmatprep.subr.mxu0 0.0
  %368 = vmatpush2.msra.mxu0 0.0
  %369 = vmatprep.subr.mxu0 0.0
  %370 = vmatpush2.msra.mxu0 0.0
  %371 = vmatprep.mubr.f32.mxu0 0.0
  %372 = vmatmul.mubr.f32.gmra.mxu0 %v305
  %v373 = vpop.f32.mrf.mxu0
  %v374 = vadd.f32 1e-05, %v373
  %v375 = vpop.f32.mrf.mxu0
  %376 = vmatprep.mubr.f32.mxu0 0.0
  %377 = vmatmul.mubr.f32.gmra.mxu0 %v306
  %v378 = vpop.f32.mrf.mxu0
  %v379 = vadd.f32 1e-05, %v378
  %v380 = vpop.f32.mrf.mxu0
  %381 = vdwg.mxu0
  %v382 = vrsqrt.pop %v374
  %v383 = vrsqrt.pop %v379
  %v384 = vlaneseq
  %v385 = vshrl.u32 %v384, 7
  %v386 = vsub.s32 1, %v385
  %v387 = vrot.slane %v211, %v386
  %v388 = vmul.f32 %v382, %v387
  %v389 = vmul.f32 %v383, %v387
  %v390 = vmul.f32 %v299, %v388
  %v391 = vmul.f32 %v302, %v389
  %v392 = vlaneseq
  %v393 = vshrl.u32 %v392, 7
  %v394 = vsub.s32 2, %v393
  %v395 = vrot.slane %v211, %v394
  %v396 = vadd.f32 %v390, %v395
  %v397 = vadd.f32 %v391, %v395
  %v398 = vtanh.pop %v396
  %v399 = vtanh.pop %v397
  %v400 = vpack.c.bf16 %v399, %v398
  %s401 = scalar_lea.vmem %s2, 64
  %v402 = vld [vmem:[%s401] sm:$0xf]
  %v403 = vld [vmem:[%s401 + $0x4] sm:$0xf]
  %v404 = vld [vmem:[%s401 + $0x8] sm:$0xf]
  %v405 = vld [vmem:[%s401 + $0xc] sm:$0xf]
  %v406 = vld [vmem:[%s401 + $0x10] sm:$0xf]
  %v407 = vld [vmem:[%s401 + $0x14] sm:$0xf]
  %v408 = vld [vmem:[%s401 + $0x18] sm:$0xf]
  %v409 = vld [vmem:[%s401 + $0x1c] sm:$0xf]
  %v410 = vld [vmem:[%s401 + $0x20] sm:$0xf]
  %v411 = vld [vmem:[%s401 + $0x24] sm:$0xf]
  %v412 = vld [vmem:[%s401 + $0x28] sm:$0xf]
  %v413 = vld [vmem:[%s401 + $0x2c] sm:$0xf]
  %v414 = vld [vmem:[%s401 + $0x30] sm:$0xf]
  %v415 = vld [vmem:[%s401 + $0x34] sm:$0xf]
  %v416 = vld [vmem:[%s401 + $0x38] sm:$0xf]
  %v417 = vld [vmem:[%s401 + $0x3c] sm:$0xf]
  %s418 = scalar_lea.vmem %s3, 8
  %v419 = vld [vmem:[%s418] sm:$0x7]
  %v420 = vlaneseq
  %v421 = vshrl.u32 %v420, 7
  %v422 = vsub.s32 0, %v421
  %v423 = vrot.slane %v419, %v422
  %v440 = vunpack.c.l.b16 %v402
  %v441 = vunpack.c.l.b16 %v403
  %v442 = vunpack.c.l.b16 %v404
  %v443 = vunpack.c.l.b16 %v405
  %v444 = vunpack.c.l.b16 %v406
  %v445 = vunpack.c.l.b16 %v407
  %v446 = vunpack.c.l.b16 %v408
  %v447 = vunpack.c.l.b16 %v409
  %v448 = vunpack.c.l.b16 %v410
  %v449 = vunpack.c.l.b16 %v411
  %v450 = vunpack.c.l.b16 %v412
  %v451 = vunpack.c.l.b16 %v413
  %v452 = vunpack.c.l.b16 %v414
  %v453 = vunpack.c.l.b16 %v415
  %v454 = vunpack.c.l.b16 %v416
  %v455 = vunpack.c.l.b16 %v417
  %v456 = vpack.c.b16 %v441, %v440
  %v457 = vpack.c.b16 %v443, %v442
  %v458 = vpack.c.b16 %v445, %v444
  %v459 = vpack.c.b16 %v447, %v446
  %v460 = vpack.c.b16 %v449, %v448
  %v461 = vpack.c.b16 %v451, %v450
  %v462 = vpack.c.b16 %v453, %v452
  %v463 = vpack.c.b16 %v455, %v454
  %472 = vmatprep.subr.bf16.mxu0 0
  %473 = vmatpush1.bf16.msra.mxu0 %v463
  %474 = vmatprep.subr.bf16.mxu0 0
  %475 = vmatpush1.bf16.msra.mxu0 %v462
  %476 = vmatprep.subr.bf16.mxu0 0
  %477 = vmatpush1.bf16.msra.mxu0 %v461
  %478 = vmatprep.subr.bf16.mxu0 0
  %479 = vmatpush1.bf16.msra.mxu0 %v460
  %480 = vmatprep.subr.bf16.mxu0 0
  %481 = vmatpush1.bf16.msra.mxu0 %v459
  %482 = vmatprep.subr.bf16.mxu0 0
  %483 = vmatpush1.bf16.msra.mxu0 %v458
  %484 = vmatprep.subr.bf16.mxu0 0
  %485 = vmatpush1.bf16.msra.mxu0 %v457
  %486 = vmatprep.subr.bf16.mxu0 0
  %487 = vmatpush1.bf16.msra.mxu0 %v456
  %488 = vmatprep.subr.bf16.mxu0 0
  %489 = vmatpush2.bf16.msra.mxu0 0
  %490 = vmatprep.subr.bf16.mxu0 0
  %491 = vmatpush2.bf16.msra.mxu0 0
  %492 = vmatprep.subr.bf16.mxu0 0
  %493 = vmatpush2.bf16.msra.mxu0 0
  %494 = vmatprep.subr.bf16.mxu0 0
  %495 = vmatpush2.bf16.msra.mxu0 0
  %496 = vmatprep.subr.bf16.mxu0 0
  %497 = vmatpush2.bf16.msra.mxu0 0
  %498 = vmatprep.subr.bf16.mxu0 0
  %499 = vmatpush2.bf16.msra.mxu0 0
  %500 = vmatprep.subr.bf16.mxu0 0
  %501 = vmatpush2.bf16.msra.mxu0 0
  %502 = vmatprep.subr.bf16.mxu0 0
  %503 = vmatpush2.bf16.msra.mxu0 0
  %504 = vmatprep.mubr.bf16.mxu0 0
  %505 = vmatmul.mubr.bf16.gmra.mxu0 %v400
  %v506 = vpop.f32.mrf.mxu0
  %v507 = vadd.f32 %v423, %v506
  %v508 = vpop.f32.mrf.mxu0
  %v509 = vpop.f32.mrf.mxu0
  %v510 = vadd.f32 %v423, %v509
  %v511 = vpop.f32.mrf.mxu0
  %512 = vdwg.mxu0
  %v513 = vmul.f32 %v507, %v507
  %v514 = vmul.f32 %v510, %v510
  %515 = vmatprep.subr.mxu0 0.0
  %516 = vmatpush1.msra.mxu0 %v36
  %517 = vmatprep.subr.mxu0 0.0
  %518 = vmatpush1.msra.mxu0 %v35
  %519 = vmatprep.subr.mxu0 0.0
  %520 = vmatpush1.msra.mxu0 %v34
  %521 = vmatprep.subr.mxu0 0.0
  %522 = vmatpush1.msra.mxu0 %v33
  %523 = vmatprep.subr.mxu0 0.0
  %524 = vmatpush1.msra.mxu0 %v32
  %525 = vmatprep.subr.mxu0 0.0
  %526 = vmatpush1.msra.mxu0 %v31
  %527 = vmatprep.subr.mxu0 0.0
  %528 = vmatpush1.msra.mxu0 %v30
  %529 = vmatprep.subr.mxu0 0.0
  %530 = vmatpush1.msra.mxu0 %v29
  %531 = vmatprep.subr.mxu0 0.0
  %532 = vmatpush1.msra.mxu0 %v28
  %533 = vmatprep.subr.mxu0 0.0
  %534 = vmatpush1.msra.mxu0 %v27
  %535 = vmatprep.subr.mxu0 0.0
  %536 = vmatpush1.msra.mxu0 %v26
  %537 = vmatprep.subr.mxu0 0.0
  %538 = vmatpush1.msra.mxu0 %v25
  %539 = vmatprep.subr.mxu0 0.0
  %540 = vmatpush1.msra.mxu0 %v24
  %541 = vmatprep.subr.mxu0 0.0
  %542 = vmatpush1.msra.mxu0 %v23
  %543 = vmatprep.subr.mxu0 0.0
  %544 = vmatpush1.msra.mxu0 %v22
  %545 = vmatprep.subr.mxu0 0.0
  %546 = vmatpush1.msra.mxu0 %v21
  %547 = vmatprep.subr.mxu0 0.0
  %548 = vmatpush2.msra.mxu0 0.0
  %549 = vmatprep.subr.mxu0 0.0
  %550 = vmatpush2.msra.mxu0 0.0
  %551 = vmatprep.subr.mxu0 0.0
  %552 = vmatpush2.msra.mxu0 0.0
  %553 = vmatprep.subr.mxu0 0.0
  %554 = vmatpush2.msra.mxu0 0.0
  %555 = vmatprep.subr.mxu0 0.0
  %556 = vmatpush2.msra.mxu0 0.0
  %557 = vmatprep.subr.mxu0 0.0
  %558 = vmatpush2.msra.mxu0 0.0
  %559 = vmatprep.subr.mxu0 0.0
  %560 = vmatpush2.msra.mxu0 0.0
  %561 = vmatprep.subr.mxu0 0.0
  %562 = vmatpush2.msra.mxu0 0.0
  %563 = vmatprep.subr.mxu0 0.0
  %564 = vmatpush2.msra.mxu0 0.0
  %565 = vmatprep.subr.mxu0 0.0
  %566 = vmatpush2.msra.mxu0 0.0
  %567 = vmatprep.subr.mxu0 0.0
  %568 = vmatpush2.msra.mxu0 0.0
  %569 = vmatprep.subr.mxu0 0.0
  %570 = vmatpush2.msra.mxu0 0.0
  %571 = vmatprep.subr.mxu0 0.0
  %572 = vmatpush2.msra.mxu0 0.0
  %573 = vmatprep.subr.mxu0 0.0
  %574 = vmatpush2.msra.mxu0 0.0
  %575 = vmatprep.subr.mxu0 0.0
  %576 = vmatpush2.msra.mxu0 0.0
  %577 = vmatprep.subr.mxu0 0.0
  %578 = vmatpush2.msra.mxu0 0.0
  %579 = vmatprep.mubr.f32.mxu0 0.0
  %580 = vmatmul.mubr.f32.gmra.mxu0 %v513
  %v581 = vpop.f32.mrf.mxu0
  %v582 = vadd.f32 1e-05, %v581
  %v583 = vpop.f32.mrf.mxu0
  %584 = vmatprep.mubr.f32.mxu0 0.0
  %585 = vmatmul.mubr.f32.gmra.mxu0 %v514
  %v586 = vpop.f32.mrf.mxu0
  %v587 = vadd.f32 1e-05, %v586
  %v588 = vpop.f32.mrf.mxu0
  %589 = vdwg.mxu0
  %v590 = vrsqrt.pop %v582
  %v591 = vrsqrt.pop %v587
  %v592 = vlaneseq
  %v593 = vshrl.u32 %v592, 7
  %v594 = vsub.s32 1, %v593
  %v595 = vrot.slane %v419, %v594
  %v596 = vmul.f32 %v590, %v595
  %v597 = vmul.f32 %v591, %v595
  %v598 = vmul.f32 %v507, %v596
  %v599 = vmul.f32 %v510, %v597
  %v600 = vlaneseq
  %v601 = vshrl.u32 %v600, 7
  %v602 = vsub.s32 2, %v601
  %v603 = vrot.slane %v419, %v602
  %v604 = vadd.f32 %v598, %v603
  %v605 = vadd.f32 %v599, %v603
  %v606 = vtanh.pop %v604
  %v607 = vtanh.pop %v605
  %v608 = vpack.c.bf16 %v607, %v606
  %s609 = scalar_lea.vmem %s2, 128
  %v610 = vld [vmem:[%s609] sm:$0xf]
  %v611 = vld [vmem:[%s609 + $0x4] sm:$0xf]
  %v612 = vld [vmem:[%s609 + $0x8] sm:$0xf]
  %v613 = vld [vmem:[%s609 + $0xc] sm:$0xf]
  %v614 = vld [vmem:[%s609 + $0x10] sm:$0xf]
  %v615 = vld [vmem:[%s609 + $0x14] sm:$0xf]
  %v616 = vld [vmem:[%s609 + $0x18] sm:$0xf]
  %v617 = vld [vmem:[%s609 + $0x1c] sm:$0xf]
  %v618 = vld [vmem:[%s609 + $0x20] sm:$0xf]
  %v619 = vld [vmem:[%s609 + $0x24] sm:$0xf]
  %v620 = vld [vmem:[%s609 + $0x28] sm:$0xf]
  %v621 = vld [vmem:[%s609 + $0x2c] sm:$0xf]
  %v622 = vld [vmem:[%s609 + $0x30] sm:$0xf]
  %v623 = vld [vmem:[%s609 + $0x34] sm:$0xf]
  %v624 = vld [vmem:[%s609 + $0x38] sm:$0xf]
  %v625 = vld [vmem:[%s609 + $0x3c] sm:$0xf]
  %s626 = scalar_lea.vmem %s3, 12
  %v627 = vld [vmem:[%s626] sm:$0x7]
  %v628 = vlaneseq
  %v629 = vshrl.u32 %v628, 7
  %v630 = vsub.s32 0, %v629
  %v631 = vrot.slane %v627, %v630
  %v648 = vunpack.c.l.b16 %v610
  %v649 = vunpack.c.l.b16 %v611
  %v650 = vunpack.c.l.b16 %v612
  %v651 = vunpack.c.l.b16 %v613
  %v652 = vunpack.c.l.b16 %v614
  %v653 = vunpack.c.l.b16 %v615
  %v654 = vunpack.c.l.b16 %v616
  %v655 = vunpack.c.l.b16 %v617
  %v656 = vunpack.c.l.b16 %v618
  %v657 = vunpack.c.l.b16 %v619
  %v658 = vunpack.c.l.b16 %v620
  %v659 = vunpack.c.l.b16 %v621
  %v660 = vunpack.c.l.b16 %v622
  %v661 = vunpack.c.l.b16 %v623
  %v662 = vunpack.c.l.b16 %v624
  %v663 = vunpack.c.l.b16 %v625
  %v664 = vpack.c.b16 %v649, %v648
  %v665 = vpack.c.b16 %v651, %v650
  %v666 = vpack.c.b16 %v653, %v652
  %v667 = vpack.c.b16 %v655, %v654
  %v668 = vpack.c.b16 %v657, %v656
  %v669 = vpack.c.b16 %v659, %v658
  %v670 = vpack.c.b16 %v661, %v660
  %v671 = vpack.c.b16 %v663, %v662
  %680 = vmatprep.subr.bf16.mxu0 0
  %681 = vmatpush1.bf16.msra.mxu0 %v671
  %682 = vmatprep.subr.bf16.mxu0 0
  %683 = vmatpush1.bf16.msra.mxu0 %v670
  %684 = vmatprep.subr.bf16.mxu0 0
  %685 = vmatpush1.bf16.msra.mxu0 %v669
  %686 = vmatprep.subr.bf16.mxu0 0
  %687 = vmatpush1.bf16.msra.mxu0 %v668
  %688 = vmatprep.subr.bf16.mxu0 0
  %689 = vmatpush1.bf16.msra.mxu0 %v667
  %690 = vmatprep.subr.bf16.mxu0 0
  %691 = vmatpush1.bf16.msra.mxu0 %v666
  %692 = vmatprep.subr.bf16.mxu0 0
  %693 = vmatpush1.bf16.msra.mxu0 %v665
  %694 = vmatprep.subr.bf16.mxu0 0
  %695 = vmatpush1.bf16.msra.mxu0 %v664
  %696 = vmatprep.subr.bf16.mxu0 0
  %697 = vmatpush2.bf16.msra.mxu0 0
  %698 = vmatprep.subr.bf16.mxu0 0
  %699 = vmatpush2.bf16.msra.mxu0 0
  %700 = vmatprep.subr.bf16.mxu0 0
  %701 = vmatpush2.bf16.msra.mxu0 0
  %702 = vmatprep.subr.bf16.mxu0 0
  %703 = vmatpush2.bf16.msra.mxu0 0
  %704 = vmatprep.subr.bf16.mxu0 0
  %705 = vmatpush2.bf16.msra.mxu0 0
  %706 = vmatprep.subr.bf16.mxu0 0
  %707 = vmatpush2.bf16.msra.mxu0 0
  %708 = vmatprep.subr.bf16.mxu0 0
  %709 = vmatpush2.bf16.msra.mxu0 0
  %710 = vmatprep.subr.bf16.mxu0 0
  %711 = vmatpush2.bf16.msra.mxu0 0
  %712 = vmatprep.mubr.bf16.mxu0 0
  %713 = vmatmul.mubr.bf16.gmra.mxu0 %v608
  %v714 = vpop.f32.mrf.mxu0
  %v715 = vadd.f32 %v631, %v714
  %v716 = vpop.f32.mrf.mxu0
  %v717 = vpop.f32.mrf.mxu0
  %v718 = vadd.f32 %v631, %v717
  %v719 = vpop.f32.mrf.mxu0
  %720 = vdwg.mxu0
  %v721 = vmul.f32 %v715, %v715
  %v722 = vmul.f32 %v718, %v718
  %723 = vmatprep.subr.mxu0 0.0
  %724 = vmatpush1.msra.mxu0 %v36
  %725 = vmatprep.subr.mxu0 0.0
  %726 = vmatpush1.msra.mxu0 %v35
  %727 = vmatprep.subr.mxu0 0.0
  %728 = vmatpush1.msra.mxu0 %v34
  %729 = vmatprep.subr.mxu0 0.0
  %730 = vmatpush1.msra.mxu0 %v33
  %731 = vmatprep.subr.mxu0 0.0
  %732 = vmatpush1.msra.mxu0 %v32
  %733 = vmatprep.subr.mxu0 0.0
  %734 = vmatpush1.msra.mxu0 %v31
  %735 = vmatprep.subr.mxu0 0.0
  %736 = vmatpush1.msra.mxu0 %v30
  %737 = vmatprep.subr.mxu0 0.0
  %738 = vmatpush1.msra.mxu0 %v29
  %739 = vmatprep.subr.mxu0 0.0
  %740 = vmatpush1.msra.mxu0 %v28
  %741 = vmatprep.subr.mxu0 0.0
  %742 = vmatpush1.msra.mxu0 %v27
  %743 = vmatprep.subr.mxu0 0.0
  %744 = vmatpush1.msra.mxu0 %v26
  %745 = vmatprep.subr.mxu0 0.0
  %746 = vmatpush1.msra.mxu0 %v25
  %747 = vmatprep.subr.mxu0 0.0
  %748 = vmatpush1.msra.mxu0 %v24
  %749 = vmatprep.subr.mxu0 0.0
  %750 = vmatpush1.msra.mxu0 %v23
  %751 = vmatprep.subr.mxu0 0.0
  %752 = vmatpush1.msra.mxu0 %v22
  %753 = vmatprep.subr.mxu0 0.0
  %754 = vmatpush1.msra.mxu0 %v21
  %755 = vmatprep.subr.mxu0 0.0
  %756 = vmatpush2.msra.mxu0 0.0
  %757 = vmatprep.subr.mxu0 0.0
  %758 = vmatpush2.msra.mxu0 0.0
  %759 = vmatprep.subr.mxu0 0.0
  %760 = vmatpush2.msra.mxu0 0.0
  %761 = vmatprep.subr.mxu0 0.0
  %762 = vmatpush2.msra.mxu0 0.0
  %763 = vmatprep.subr.mxu0 0.0
  %764 = vmatpush2.msra.mxu0 0.0
  %765 = vmatprep.subr.mxu0 0.0
  %766 = vmatpush2.msra.mxu0 0.0
  %767 = vmatprep.subr.mxu0 0.0
  %768 = vmatpush2.msra.mxu0 0.0
  %769 = vmatprep.subr.mxu0 0.0
  %770 = vmatpush2.msra.mxu0 0.0
  %771 = vmatprep.subr.mxu0 0.0
  %772 = vmatpush2.msra.mxu0 0.0
  %773 = vmatprep.subr.mxu0 0.0
  %774 = vmatpush2.msra.mxu0 0.0
  %775 = vmatprep.subr.mxu0 0.0
  %776 = vmatpush2.msra.mxu0 0.0
  %777 = vmatprep.subr.mxu0 0.0
  %778 = vmatpush2.msra.mxu0 0.0
  %779 = vmatprep.subr.mxu0 0.0
  %780 = vmatpush2.msra.mxu0 0.0
  %781 = vmatprep.subr.mxu0 0.0
  %782 = vmatpush2.msra.mxu0 0.0
  %783 = vmatprep.subr.mxu0 0.0
  %784 = vmatpush2.msra.mxu0 0.0
  %785 = vmatprep.subr.mxu0 0.0
  %786 = vmatpush2.msra.mxu0 0.0
  %787 = vmatprep.mubr.f32.mxu0 0.0
  %788 = vmatmul.mubr.f32.gmra.mxu0 %v721
  %v789 = vpop.f32.mrf.mxu0
  %v790 = vadd.f32 1e-05, %v789
  %v791 = vpop.f32.mrf.mxu0
  %792 = vmatprep.mubr.f32.mxu0 0.0
  %793 = vmatmul.mubr.f32.gmra.mxu0 %v722
  %v794 = vpop.f32.mrf.mxu0
  %v795 = vadd.f32 1e-05, %v794
  %v796 = vpop.f32.mrf.mxu0
  %797 = vdwg.mxu0
  %v798 = vrsqrt.pop %v790
  %v799 = vrsqrt.pop %v795
  %v800 = vlaneseq
  %v801 = vshrl.u32 %v800, 7
  %v802 = vsub.s32 1, %v801
  %v803 = vrot.slane %v627, %v802
  %v804 = vmul.f32 %v798, %v803
  %v805 = vmul.f32 %v799, %v803
  %v806 = vmul.f32 %v715, %v804
  %v807 = vmul.f32 %v718, %v805
  %v808 = vlaneseq
  %v809 = vshrl.u32 %v808, 7
  %v810 = vsub.s32 2, %v809
  %v811 = vrot.slane %v627, %v810
  %v812 = vadd.f32 %v806, %v811
  %v813 = vadd.f32 %v807, %v811
  %v814 = vtanh.pop %v812
  %v815 = vtanh.pop %v813
  %816 = vst [vmem:[%s5] sm:$0xff] %v814
  %817 = vst [vmem:[%s5 + $0x8] sm:$0xff] %v815
  // Predicated region
  $region22: #{node_network_forward.1} parent=0 // pred_check
    _
  $region23: #{node_network_forward.1} parent=0 // pred_check_branch
    %819 = sbr.rel (0) target = $region25
  $region24: #{node_network_forward.1} parent=0 // pred_region
    _
  $region25: #{node_network_forward.1} parent=0 // pred_fallthru
    _
  // Predicated region
  $region26: #{node_network_forward.1} parent=0 // pred_check
    _
  $region27: #{node_network_forward.1} parent=0 // pred_check_branch
    %821 = sbr.rel (0) target = $region29
  $region28: #{node_network_forward.1} parent=0 // pred_region
    _
  $region29: #{node_network_forward.1} parent=0 // pred_fallthru
    _

</llo_original>
